<compile_context>
chip_gen: v7x
topology: tpu7x:2x2x1
jax: 0.10.0
libtpu: 0.0.40
codegen_flags: <defaults>
</compile_context>

<pallas_src>
import functools

import jax
import jax.numpy as jnp
from jax import lax
from jax.experimental import pallas as pl
from jax.experimental.pallas import tpu as pltpu


def _round_up(x, m):
    return (x + m - 1) // m * m


def _plan(num_train, tile_n, num_chunks):
    """Tiling plan: (padded_cols, tile, num_chunks, inner_steps)."""
    tile_req = max(128, (int(tile_n) // 128) * 128)      # lane tiles: k*128
    padded = _round_up(int(num_train), 128)
    tile = min(tile_req, padded)
    padded = _round_up(padded, tile)
    n_tiles = padded // tile
    chunks = max(1, min(int(num_chunks), n_tiles))
    while n_tiles % chunks:
        chunks -= 1
    return padded, tile, chunks, n_tiles // chunks


def init_dpsh_state(num_train, bit, n_class, *, tile_n=16384, num_chunks=1,
                    storage_dtype=jnp.bfloat16):
    """Zero-initialized persistent buffer: [U.T ; Y.T], lane-padded, bf16.

    NOTE: the padding columns MUST stay exactly zero (they are never written by
    the in-range scatter) -- the kernel relies on that invariant to replace the
    per-element padding mask with a constant correction.
    """
    padded, _, _, _ = _plan(num_train, tile_n, num_chunks)
    return jnp.zeros((bit + n_class, padded), storage_dtype)


def _dpsh_kernel(uy_ref, buf_ref, out_ref, acc_ref, *, compute_dtype):
    """Grid = (chunks, inner).  Streams UY_T lane-tiles; accumulates the
    (B_pad, tile) likelihood terms elementwise; one cross-lane reduce at the
    end of each chunk."""
    n = pl.program_id(1)
    b_pad = uy_ref.shape[0] // 2          # rows padded to a multiple of 8

    @pl.when(n == 0)
    def _init():
        acc_ref[...] = jnp.zeros_like(acc_ref)

    # One fused MXU pass: block-diag([0.5*u, y]) @ [U ; Y] tile -> (2*Bp, tile)
    res = jnp.dot(uy_ref[...], buf_ref[...], preferred_element_type=jnp.float32)
    ip = res[:b_pad, :]                   # 0.5 * u @ U_tile (sublane-aligned)
    # s==1: log(1+exp(-|ip|)) + max(ip,0) - ip == softplus(-ip)
    # s==0:                                       softplus( ip)
    # Fold both via t = s ? -ip : ip  (drops the bool cast, mul and subtract).
    t = jnp.where(res[b_pad:, :] > 0.0, -ip, ip).astype(compute_dtype)
    ll = jnp.log(1.0 + jnp.exp(-jnp.abs(t))) + jnp.maximum(t, 0.0)

    # pure VPU elementwise accumulation (no per-step cross-lane reduce, no mask)
    acc_ref[...] += ll.astype(jnp.float32)

    @pl.when(n == pl.num_programs(1) - 1)
    def _finalize():
        total = jnp.sum(acc_ref[...])     # this chunk's raw likelihood sum
        rows = lax.broadcasted_iota(jnp.int32, out_ref.shape, 0)
        cols = lax.broadcasted_iota(jnp.int32, out_ref.shape, 1)
        out_ref[...] = jnp.where((rows == 0) & (cols == 0), total,
                                 jnp.float32(0.0))


def dpsh_loss(u, y, ind, out_label, UY_T, *, num_train, alpha,
              tile_n=16384, num_chunks=1, elementwise_dtype=jnp.float32):
    """Functional DPSHLoss.forward. Returns (sum_loss, new_UY_T_state).

    tile_n:      lane tile over num_train (multiple of 128).  Keep the derived
                 scoped VMEM <= ~32 MiB on v7x (64 MiB physical per TC); on
                 v5e/v6e up to ~44 MiB is fine (explicit vmem_limit is set).
    num_chunks:  1 for single-TensorCore parts (v5e/v6e); 2 on v7x so the
                 leading "parallel" axis shards the num_train stream across
                 both cores.
    elementwise_dtype: jnp.bfloat16 on v6e/v7x runs the softplus chain on the
                 bf16 VPU/EUP paths (~2x on the slot that binds on v7x) at a
                 small accuracy cost; keep f32 on v5e and for exact parity.
    """
    u = u.astype(jnp.float32)
    y = y.astype(jnp.float32)
    out_label = out_label.astype(jnp.float32)
    batch, bit = u.shape
    n_class = y.shape[1]
    K = bit + n_class
    storage_dtype = UY_T.dtype
    assert UY_T.shape[0] == K

    padded, tile, chunks, inner = _plan(num_train, tile_n, num_chunks)
    assert UY_T.shape[1] == padded, (UY_T.shape, padded)

    # ---- state update (self.U[ind,:]=u ; self.Y[ind,:]=y) -------------------
    # Plain-JAX scatter on the transposed bf16 buffer; donate UY_T in the
    # caller's jit so it happens in place.
    # TODO(synk): at large batch sizes, bitcast-pack bf16 pairs to u32 (or use
    # a small DMA kernel) if this column scatter shows up on the critical path.
    new_cols = jnp.concatenate([u, y], axis=1).astype(storage_dtype)   # (B, K)
    UY_T = UY_T.at[:, ind].set(new_cols.T)

    # ---- block-diagonal LHS, rows padded to a multiple of 8 ------------------
    # [[0.5*u, 0], [0, y]] so one MXU pass yields 0.5*u@U.T (rows :Bp) and
    # y@Y.T (rows Bp:).  Bp % 8 == 0 keeps the result row-split tile-aligned.
    # Zero padding rows/cols each contribute exactly softplus(0)=ln2 to the
    # sum; removed by a closed-form correction below (no in-loop mask).
    b_pad = _round_up(batch, 8)
    uy_bd = jnp.zeros((2 * b_pad, K), jnp.float32)
    uy_bd = uy_bd.at[:batch, :bit].set(0.5 * u)
    uy_bd = uy_bd.at[b_pad:b_pad + batch, bit:].set(y)
    uy_bd = uy_bd.astype(storage_dtype)

    # ---- VMEM budget / cost hints --------------------------------------------
    esize = jnp.dtype(storage_dtype).itemsize
    vmem_est = (2 * K * tile * esize              # UY_T tile, double-buffered
                + 2 * 2 * b_pad * K * esize       # uy_bd, double-buffered
                + b_pad * tile * 4                # f32 accumulator scratch
                + 4 * b_pad * tile * 4            # dot result + elementwise tmp
                + 2 * 8 * 128 * 4)                # output block
    if vmem_est > 44 * (1 << 20):
        raise ValueError(
            f"tile_n={tile_n} needs ~{vmem_est >> 20} MiB scoped VMEM; lower "
            "tile_n (keep <=~32 MiB on v7x, <=~44 MiB on v5e/v6e).")
    vmem_limit = int(min(48 * (1 << 20),
                         max(32 * (1 << 20), vmem_est + (8 << 20))))

    cost = pl.CostEstimate(
        flops=2 * (2 * b_pad) * K * padded + 8 * b_pad * padded,
        transcendentals=2 * b_pad * padded,
        bytes_accessed=K * padded * esize + 2 * b_pad * K * esize
                       + chunks * 8 * 128 * 4)

    kernel = functools.partial(_dpsh_kernel, compute_dtype=elementwise_dtype)

    out = pl.pallas_call(
        kernel,
        out_shape=jax.ShapeDtypeStruct((chunks * 8, 128), jnp.float32),
        grid_spec=pltpu.PrefetchScalarGridSpec(
            num_scalar_prefetch=0,
            grid=(chunks, inner),
            in_specs=[
                pl.BlockSpec((2 * b_pad, K), lambda c, n: (0, 0)),        # uy_bd
                pl.BlockSpec((K, tile),
                             lambda c, n, _i=inner: (0, c * _i + n)),     # UY_T
            ],
            out_specs=pl.BlockSpec((8, 128), lambda c, n: (c, 0)),
            scratch_shapes=[pltpu.VMEM((b_pad, tile), jnp.float32)],
        ),
        compiler_params=pltpu.CompilerParams(
            # NOTE: on v7x verify the leading "parallel" axis actually shards
            # across both TensorCores (xprof); otherwise switch to CORE_PARALLEL.
            dimension_semantics=("parallel", "arbitrary"),
            vmem_limit_bytes=vmem_limit),
        cost_estimate=cost,
    )(uy_bd, UY_T)

    # ---- epilogue in plain JAX (tiny; out of the hot loop) -------------------
    # Every padded element of the (B_pad, padded) likelihood block is exactly
    # softplus(0) = ln 2 (zero state padding + zero uy_bd padding rows), so
    # subtract the closed-form constant instead of masking in the kernel.
    zero = jnp.zeros((), elementwise_dtype)
    pad_elem = (jnp.log(1.0 + jnp.exp(-jnp.abs(zero)))
                + jnp.maximum(zero, zero)).astype(jnp.float32)
    n_pad_elems = b_pad * padded - batch * num_train
    ll_sum = jnp.sum(out) - pad_elem * jnp.float32(n_pad_elems)
    ll_mean = ll_sum / jnp.float32(batch * num_train)

    sgn = jnp.sign(u)
    quant = jnp.float32(alpha) * jnp.mean((u - sgn) ** 2)
    p = jax.nn.sigmoid(out_label)
    cr = jnp.mean(-(y * jnp.maximum(jnp.log(p), -100.0)
                    + (1.0 - y) * jnp.maximum(jnp.log(1.0 - p), -100.0)))
    loss = 0.2 * (ll_mean + quant) + 0.8 * cr
    return loss, UY_T


def _reference(u, y, ind, out_label, num_train, bit, n_class, alpha,
               storage_dtype=jnp.float32):
    """Pure-JAX replica of the PyTorch forward (optionally storage-quantized)."""
    cast = lambda a: a.astype(storage_dtype).astype(jnp.float32)
    U = jnp.zeros((num_train, bit), jnp.float32).at[ind].set(u)
    Y = jnp.zeros((num_train, n_class), jnp.float32).at[ind].set(y)
    p = jax.nn.sigmoid(out_label)
    cr = jnp.mean(-(y * jnp.maximum(jnp.log(p), -100.0)
                    + (1.0 - y) * jnp.maximum(jnp.log(1.0 - p), -100.0)))
    s = (cast(y) @ cast(Y).T > 0).astype(jnp.float32)
    ip = cast(0.5 * u) @ cast(U).T
    ll = jnp.mean(jnp.log(1.0 + jnp.exp(-jnp.abs(ip)))
                  + jnp.maximum(ip, 0.0) - s * ip)
    quant = alpha * jnp.mean((u - jnp.sign(u)) ** 2)
    return 0.2 * (ll + quant) + 0.8 * cr


if __name__ == "__main__":
    def run_case(num_train, bit, n_class, batch, alpha, tile_n, num_chunks, seed):
        key = jax.random.PRNGKey(seed)
        k1, k2, k3 = jax.random.split(key, 3)
        u = jax.random.normal(k1, (batch, bit), dtype=jnp.float32)
        y = (jax.random.uniform(k2, (batch, n_class)) > 0.5).astype(jnp.float32)
        out_label = jax.random.normal(k3, (batch, n_class), dtype=jnp.float32)
        ind = (jnp.arange(batch, dtype=jnp.int32) * 7919) % num_train

        state = init_dpsh_state(num_train, bit, n_class, tile_n=tile_n,
                                num_chunks=num_chunks)
        step = jax.jit(
            functools.partial(dpsh_loss, num_train=num_train, alpha=alpha,
                              tile_n=tile_n, num_chunks=num_chunks),
            donate_argnums=(4,))
        loss, state_new = step(u, y, ind, out_label, state)
        loss = jax.block_until_ready(loss)

        ref_q = _reference(u, y, ind, out_label, num_train, bit, n_class,
                           alpha, storage_dtype=jnp.bfloat16)
        ref_f = _reference(u, y, ind, out_label, num_train, bit, n_class,
                           alpha, storage_dtype=jnp.float32)
        assert abs(float(loss) - float(ref_q)) < 1e-3, (float(loss), float(ref_q))
        assert abs(float(loss) - float(ref_f)) < 5e-3, (float(loss), float(ref_f))

        # state scatter check: stored columns equal bf16([u, y]).T
        got = state_new[:, ind].T.astype(jnp.float32)
        want = jnp.concatenate([u, y], axis=1).astype(state_new.dtype
                                                      ).astype(jnp.float32)
        assert bool(jnp.allclose(got, want)), "state update mismatch"

    # default big-tile config (tile collapses to the padded width at this size),
    # batch already a multiple of 8 -> no row padding
    run_case(num_train=64, bit=32, n_class=16, batch=8, alpha=0.1,
             tile_n=16384, num_chunks=1, seed=0)
    # exercises multi-tile streaming, 2-chunk "parallel" axis, column padding
    # (500 -> 512) and row padding (batch 6 -> 8) with the ln2 correction
    run_case(num_train=500, bit=32, n_class=16, batch=6, alpha=0.1,
             tile_n=128, num_chunks=2, seed=1)

    print("KERNEL_OK")
</pallas_src>

<mosaic_0001>
module attributes {stable_mosaic.version = 11 : i64} {
  func.func @_dpsh_kernel(%arg0: i32, %arg1: i32, %arg2: memref<16x48xbf16, #tpu.memory_space<vmem>>, %arg3: memref<48x128xbf16, #tpu.memory_space<vmem>>, %arg4: memref<8x128xf32, #tpu.memory_space<vmem>>, %arg5: memref<8x128xf32, #tpu.memory_space<vmem>>) attributes {dimension_semantics = [#tpu.dimension_semantics<parallel>, #tpu.dimension_semantics<arbitrary>], iteration_bounds = array<i64: 1, 1>, scalar_prefetch = 0 : i64, scratch_operands = 1 : i64, tpu.core_type = #tpu.core_type<tc>, window_params = [{pipeline_mode = #tpu.pipeline_mode<synchronous>, transform_indices = @transform_0, window_bounds = array<i64: 16, 48>}, {transform_indices = @transform_1, window_bounds = array<i64: 48, 128>}, {transform_indices = @transform_2, window_bounds = array<i64: 8, 128>}]} {
    %c0_i32 = arith.constant 0 : i32
    %0 = arith.cmpi eq, %arg1, %c0_i32 : i32
    %1 = arith.extui %0 : i1 to i32
    %c0_i32_0 = arith.constant 0 : i32
    %2 = arith.cmpi ne, %1, %c0_i32_0 : i32
    scf.if %2 {
      %cst_15 = arith.constant 0.000000e+00 : f32
      %29 = vector.broadcast %cst_15 : f32 to vector<8x128xf32>
      %c0_16 = arith.constant 0 : index
      %c0_17 = arith.constant 0 : index
      %30 = vector.load %arg5[%c0_16, %c0_17] : memref<8x128xf32, #tpu.memory_space<vmem>>, vector<8x128xf32>
      tpu.vector_store %arg5[%c0_16, %c0_17], %29 {strides = array<i32>} : memref<8x128xf32, #tpu.memory_space<vmem>>, vector<8x128xf32>,
    } else {
    }
    %c0 = arith.constant 0 : index
    %c0_1 = arith.constant 0 : index
    %3 = vector.load %arg2[%c0, %c0_1] : memref<16x48xbf16, #tpu.memory_space<vmem>>, vector<16x48xbf16>
    %c0_2 = arith.constant 0 : index
    %c0_3 = arith.constant 0 : index
    %4 = vector.load %arg3[%c0_2, %c0_3] : memref<48x128xbf16, #tpu.memory_space<vmem>>, vector<48x128xbf16>
    %cst = arith.constant dense<0.000000e+00> : vector<16x128xf32>
    %5 = tpu.matmul %3, %4, %cst {dimension_numbers = #tpu.dot_dimension_numbers<[1], [0], [0], [1], [0, 0, 1, 1], [], []>} : vector<16x48xbf16>, vector<48x128xbf16>, vector<16x128xf32> -> vector<16x128xf32>
    %6 = vector.extract_strided_slice %5 {offsets = [0, 0], sizes = [8, 128], strides = [1, 1]} : vector<16x128xf32> to vector<8x128xf32>
    %7 = vector.extract_strided_slice %5 {offsets = [8, 0], sizes = [8, 128], strides = [1, 1]} : vector<16x128xf32> to vector<8x128xf32>
    %cst_4 = arith.constant 0.000000e+00 : f32
    %8 = vector.broadcast %cst_4 : f32 to vector<8x128xf32>
    %9 = arith.cmpf ogt, %7, %8 : vector<8x128xf32>
    %cst_5 = arith.constant 0.000000e+00 : f32
    %10 = vector.broadcast %cst_5 : f32 to vector<8x128xf32>
    %11 = arith.subf %10, %6 : vector<8x128xf32>
    %12 = arith.select %9, %11, %6 : vector<8x128xi1>, vector<8x128xf32>
    %13 = math.absf %12 : vector<8x128xf32>
    %cst_6 = arith.constant 0.000000e+00 : f32
    %14 = vector.broadcast %cst_6 : f32 to vector<8x128xf32>
    %15 = arith.subf %14, %13 : vector<8x128xf32>
    %16 = math.exp %15 : vector<8x128xf32>
    %cst_7 = arith.constant 1.000000e+00 : f32
    %17 = vector.broadcast %cst_7 : f32 to vector<8x128xf32>
    %18 = arith.addf %17, %16 : vector<8x128xf32>
    %19 = math.log %18 : vector<8x128xf32>
    %cst_8 = arith.constant 0.000000e+00 : f32
    %20 = vector.broadcast %cst_8 : f32 to vector<8x128xf32>
    %21 = arith.maximumf %12, %20 : vector<8x128xf32>
    %22 = arith.addf %19, %21 : vector<8x128xf32>
    %c0_9 = arith.constant 0 : index
    %c0_10 = arith.constant 0 : index
    %23 = vector.load %arg5[%c0_9, %c0_10] : memref<8x128xf32, #tpu.memory_space<vmem>>, vector<8x128xf32>
    %24 = arith.addf %23, %22 : vector<8x128xf32>
    %c0_11 = arith.constant 0 : index
    %c0_12 = arith.constant 0 : index
    %25 = vector.load %arg5[%c0_11, %c0_12] : memref<8x128xf32, #tpu.memory_space<vmem>>, vector<8x128xf32>
    tpu.vector_store %arg5[%c0_11, %c0_12], %24 {strides = array<i32>} : memref<8x128xf32, #tpu.memory_space<vmem>>, vector<8x128xf32>,
    %c0_i32_13 = arith.constant 0 : i32
    %26 = arith.cmpi eq, %arg1, %c0_i32_13 : i32
    %27 = arith.extui %26 : i1 to i32
    %c0_i32_14 = arith.constant 0 : i32
    %28 = arith.cmpi ne, %27, %c0_i32_14 : i32
    scf.if %28 {
      %c0_15 = arith.constant 0 : index
      %c0_16 = arith.constant 0 : index
      %29 = vector.load %arg5[%c0_15, %c0_16] : memref<8x128xf32, #tpu.memory_space<vmem>>, vector<8x128xf32>
      %30 = vector.shape_cast %29 : vector<8x128xf32> to vector<1x8x128xf32>
      %cst_17 = arith.constant dense<0.000000e+00> : vector<1xf32>
      %31 = vector.multi_reduction <add>, %30, %cst_17 [1, 2] : vector<1x8x128xf32> to vector<1xf32>
      %32 = vector.shape_cast %31 : vector<1xf32> to vector<1x1x1xf32>
      %33 = vector.extract %32[0, 0, 0] : f32 from vector<1x1x1xf32>
      %34 = tpu.iota {dimensions = array<i32: 0>} : vector<8x128xi32>
      %35 = tpu.iota {dimensions = array<i32: 1>} : vector<8x128xi32>
      %c0_i32_18 = arith.constant 0 : i32
      %36 = vector.broadcast %c0_i32_18 : i32 to vector<8x128xi32>
      %37 = arith.cmpi eq, %34, %36 : vector<8x128xi32>
      %c0_i32_19 = arith.constant 0 : i32
      %38 = vector.broadcast %c0_i32_19 : i32 to vector<8x128xi32>
      %39 = arith.cmpi eq, %35, %38 : vector<8x128xi32>
      %40 = arith.andi %37, %39 : vector<8x128xi1>
      %cst_20 = arith.constant 0.000000e+00 : f32
      %41 = vector.broadcast %33 : f32 to vector<8x128xf32>
      %42 = vector.broadcast %cst_20 : f32 to vector<8x128xf32>
      %43 = arith.select %40, %41, %42 : vector<8x128xi1>, vector<8x128xf32>
      %c0_21 = arith.constant 0 : index
      %c0_22 = arith.constant 0 : index
      %44 = vector.load %arg4[%c0_21, %c0_22] : memref<8x128xf32, #tpu.memory_space<vmem>>, vector<8x128xf32>
      tpu.vector_store %arg4[%c0_21, %c0_22], %43 {strides = array<i32>} : memref<8x128xf32, #tpu.memory_space<vmem>>, vector<8x128xf32>,
    } else {
    }
    return
  }
  func.func @transform_0(%arg0: i32, %arg1: i32) -> (i32, i32) {
    %c0_i32 = arith.constant 0 : i32
    %c0_i32_0 = arith.constant 0 : i32
    %c0_i32_1 = arith.constant 0 : i32
    return %c0_i32, %c0_i32_0 : i32, i32
  }
  func.func @transform_1(%arg0: i32, %arg1: i32) -> (i32, i32) {
    %c1_i32 = arith.constant 1 : i32
    %0 = arith.muli %arg0, %c1_i32 : i32
    %1 = arith.addi %0, %arg1 : i32
    %c0_i32 = arith.constant 0 : i32
    %c0_i32_0 = arith.constant 0 : i32
    return %c0_i32, %1 : i32, i32
  }
  func.func @transform_2(%arg0: i32, %arg1: i32) -> (i32, i32) {
    %c0_i32 = arith.constant 0 : i32
    %c0_i32_0 = arith.constant 0 : i32
    return %arg0, %c0_i32 : i32, i32
  }
}

</mosaic_0001>

<llo_original>
// kernel: dpsh_loss.1
$region0: #{dpsh_loss.1}
  #allocation0 [shape = 'u32[]', space=smem, size = 0x4, offset = 0x4, fixed_abs, tag = 'smem constant byte address 0x4 - core index']
  #allocation1 [shape = 'u32[144,128]{1,0:T(1,128)}', space=vmem, size = 0x12000, scoped, tag = 'internal scratch']
  #allocation2 [shape = 'f32[8,128]{1,0:T(8,128)}', space=vmem, size = 0x1000, scoped, tag = 'scratch operand']
  %s0 = inlined_call_operand.vmem [shape: bf16[16,48], index: 0, kind: input, shape index: {}]
  %s1 = inlined_call_operand.vmem [shape: bf16[48,128], index: 1, kind: input, shape index: {}]
  %s2 = inlined_call_operand.vmem [shape: f32[8,128], index: 2, kind: output, shape index: {}]
  %s3 = sld [smem:[#allocation0]]
  $region26: #{dpsh_loss.1} parent=0
    _
  %s5 = ssub.s32 1, %s3
  %s6 = scalar_select 0, %s5, %s3
  // Predicated region
  $region2: #{dpsh_loss.1} parent=0 // pred_check
    _
  $region3: #{dpsh_loss.1} parent=0 // pred_check_branch
    %8 = sbr.rel (0) target = $region5
  $region4: #{dpsh_loss.1} parent=0 // pred_region
    _
  $region5: #{dpsh_loss.1} parent=0 // pred_fallthru
    _
  // Predicated region
  $region6: #{dpsh_loss.1} parent=0 // pred_check
    _
  $region7: #{dpsh_loss.1} parent=0 // pred_check_branch
    %10 = sbr.rel (0) target = $region9
  $region8: #{dpsh_loss.1} parent=0 // pred_region
    %s11 = sadd.s32 0, 0
    %p12 = scmp.lt.s32.totalorder %s11, 0
    %s13 = scalar_select %p12, %s11, 0
    %s14 = smul.addr %s13, 4
    %s15 = scalar_lea.vmem %s1, %s14
    %s16 = sadd.s32 0, 0
  $region9: #{dpsh_loss.1} parent=0 // pred_fallthru
    _
  %s17 = sadd.s32 0, 0
  %p18 = scmp.lt.s32.totalorder %s17, 0
  %s19 = scalar_select %p18, %s17, 0
  %s20 = smul.addr %s19, 4
  %s21 = scalar_lea.vmem %s1, %s20
  %s22 = sadd.s32 0, 0
  %p23 = scmp.lt.s32.totalorder %s22, 0
  %s24 = scalar_select %p23, %s22, 0
  %s25 = smul.addr %s24, 4
  %s26 = scalar_lea.vmem %s1, %s25
  %s27 = sadd.s32 0, 0
  %p29 = scmp.eq.s32.totalorder 0, 0
  // Predicated region
  $region10: #{dpsh_loss.1} parent=0 // pred_check
    %p30 = pneg %p29
  $region11: #{dpsh_loss.1} parent=0 // pred_check_branch
    %32 = sbr.rel (%p30) target = $region13
  $region12: #{dpsh_loss.1} parent=0 // pred_region
    %33 = vst [vmem:[#allocation2] sm:$0xff] 0.0
  $region13: #{dpsh_loss.1} parent=0 // pred_fallthru
    _
  %v34 = vld [vmem:[%s0] sm:$0xf]
  %v35 = vld [vmem:[%s0 + $0x4] sm:$0xf]
  %v36 = vld [vmem:[%s26] sm:$0xf]
  %v37 = vld [vmem:[%s26 + $0x4] sm:$0xf]
  %v38 = vld [vmem:[%s26 + $0x8] sm:$0xf]
  %v39 = vld [vmem:[%s26 + $0xc] sm:$0xf]
  %v40 = vld [vmem:[%s26 + $0x10] sm:$0xf]
  %v41 = vld [vmem:[%s26 + $0x14] sm:$0xf]
  %v44 = vunpack.c.l.b16 %v34
  %v45 = vunpack.c.l.b16 %v35
  %v46 = vpack.c.b16 %v45, %v44
  %v53 = vunpack.c.l.b16 %v36
  %v54 = vunpack.c.l.b16 %v37
  %v55 = vunpack.c.l.b16 %v38
  %v56 = vunpack.c.l.b16 %v39
  %v57 = vunpack.c.l.b16 %v40
  %v58 = vunpack.c.l.b16 %v41
  %v59 = vpack.c.b16 %v54, %v53
  %v60 = vpack.c.b16 %v56, %v55
  %v61 = vpack.c.b16 %v58, %v57
  %vm65 = vcmask 392192
  %v67 = vsel %vm65, %v46, 0
  %69 = vmatprep.subr.bf16.mxu0 0
  %70 = vmatpush1.bf16.msra.mxu0 %v59
  %71 = vmatprep.subr.bf16.mxu0 0
  %72 = vmatpush1.bf16.msra.mxu0 %v60
  %73 = vmatprep.subr.bf16.mxu0 0
  %74 = vmatpush1.bf16.msra.mxu0 %v61
  %75 = vmatprep.subr.bf16.mxu0 0
  %76 = vmatpush1.bf16.msra.mxu0 0
  %77 = vmatprep.subr.bf16.mxu0 0
  %78 = vmatpush1.bf16.msra.mxu0 0
  %79 = vmatprep.subr.bf16.mxu0 0
  %80 = vmatpush1.bf16.msra.mxu0 0
  %81 = vmatprep.subr.bf16.mxu0 0
  %82 = vmatpush1.bf16.msra.mxu0 0
  %83 = vmatprep.subr.bf16.mxu0 0
  %84 = vmatpush1.bf16.msra.mxu0 0
  %85 = vmatprep.subr.bf16.mxu0 0
  %86 = vmatpush1.bf16.msra.mxu0 0
  %87 = vmatprep.subr.bf16.mxu0 0
  %88 = vmatpush1.bf16.msra.mxu0 0
  %89 = vmatprep.subr.bf16.mxu0 0
  %90 = vmatpush1.bf16.msra.mxu0 0
  %91 = vmatprep.subr.bf16.mxu0 0
  %92 = vmatpush1.bf16.msra.mxu0 0
  %93 = vmatprep.subr.bf16.mxu0 0
  %94 = vmatpush1.bf16.msra.mxu0 0
  %95 = vmatprep.subr.bf16.mxu0 0
  %96 = vmatpush1.bf16.msra.mxu0 0
  %97 = vmatprep.subr.bf16.mxu0 0
  %98 = vmatpush1.bf16.msra.mxu0 0
  %99 = vmatprep.subr.bf16.mxu0 0
  %100 = vmatpush1.bf16.msra.mxu0 0
  %101 = vmatprep.mubr.bf16.mxu0 0
  %102 = vmatmul.mubr.bf16.gmra.mrb[0].mxu0 %v67
  %v103 = vpop.f32.mrb[0].mxu0
  %v104 = vadd.f32 0.0, %v103
  %v105 = vpop.f32.mrb[0].mxu0
  %v106 = vpop.f32.mrb[0].mxu0
  %v107 = vadd.f32 0.0, %v106
  %v108 = vpop.f32.mrb[0].mxu0
  %109 = vdwg.mxu0
  %vm110 = vcmp.gt.f32.partialorder %v107, 0.0
  %v111 = vsub.f32 0.0, %v104
  %v112 = vsel %vm110, %v111, %v104
  %v113 = vand.u32 2147483647, %v112
  %v114 = vsub.f32 0.0, %v113
  %v115 = vmul.f32 %v114, 1.442695
  %v116 = vpow.pop %v115
  %v117 = vadd.f32 %v116, 1.0
  %v118 = vlog2.pop %v117
  %v119 = vmul.f32 %v118, 0.6931472
  %v120 = vmax.f32 %v112, 0.0
  %v121 = vadd.f32 %v119, %v120
  %v122 = vld [vmem:[#allocation2] sm:$0xff]
  %v123 = vadd.f32 %v122, %v121
  %124 = vst [vmem:[#allocation2] sm:$0xff] %v123
  // Predicated region
  $region14: #{dpsh_loss.1} parent=0 // pred_check
    %p125 = pneg %p29
  $region15: #{dpsh_loss.1} parent=0 // pred_check_branch
    %127 = sbr.rel (%p125) target = $region17
  $region16: #{dpsh_loss.1} parent=0 // pred_region
    %v128 = vld [vmem:[#allocation2] sm:$0xff]
    %129 = vadd.xlane.f32.xlu0 %v128
    %v130 = vpop.xlane.xlu0 %129
    %v131 = vrot.slane %v130, 4
    %v132 = vadd.f32 %v130, %v131
    %v133 = vrot.slane %v132, 2
    %v134 = vadd.f32 %v132, %v133
    %v135 = vrot.slane %v134, 1
    %v136 = vadd.f32 %v134, %v135
    %s137 = vtos %v136
    %v138 = vlaneseq
    %v139 = vshrl.u32 %v138, 7
    %v140 = vlaneseq
    %v141 = vand.u32 %v140, 127
    %vm142 = vcmp.eq.s32.totalorder %v139, 0
    %vm143 = vcmp.eq.s32.totalorder %v141, 0
    %vm144 = vmand %vm142, %vm143
    %v145 = vstv %s137
    %v146 = vsel %vm144, %v145, 0.0
    %147 = vst [vmem:[%s2] sm:$0xff] %v146
  $region17: #{dpsh_loss.1} parent=0 // pred_fallthru
    _
  // Predicated region
  $region18: #{dpsh_loss.1} parent=0 // pred_check
    _
  $region19: #{dpsh_loss.1} parent=0 // pred_check_branch
    %149 = sbr.rel (0) target = $region21
  $region20: #{dpsh_loss.1} parent=0 // pred_region
    _
  $region21: #{dpsh_loss.1} parent=0 // pred_fallthru
    _
  // Predicated region
  $region22: #{dpsh_loss.1} parent=0 // pred_check
    _
  $region23: #{dpsh_loss.1} parent=0 // pred_check_branch
    %151 = sbr.rel (0) target = $region25
  $region24: #{dpsh_loss.1} parent=0 // pred_region
    _
  $region25: #{dpsh_loss.1} parent=0 // pred_fallthru
    _

</llo_original>
